<compile_context>
chip_gen: v7x
topology: tpu7x:2x2x1
jax: 0.10.0
libtpu: 0.0.40
codegen_flags: <defaults>
</compile_context>

<pallas_src>
import functools

import numpy as np
import jax
import jax.numpy as jnp
from jax import lax
from jax.experimental import pallas as pl
from jax.experimental.pallas import tpu as pltpu

NCORES = 2          # leading "parallel" grid axis: both TCs on v7x, serial groups elsewhere
ACC_LANES = 128     # lane width of the VMEM partial accumulator (one vreg of lanes)


def _cdiv(a, b):
    return -(-a // b)


def _round_up(x, m):
    return _cdiv(x, m) * m


# --------------------------------------------------------------------------------------
# Kernel: masked + clamped partial sums for the pairwise complex loss
# (core of get_complex_pair_loss).  Streams only the loss tensor.
# --------------------------------------------------------------------------------------
def _pair_loss_kernel(row_cid_ref, col_cid_ref, loss_ref, out_ref, acc_ref, *,
                      num_chains, intra_clamp, inter_clamp):
    # row_cid_ref : (TILE_R, 1)        i32      chain id per row residue (-1 = padded/phantom row)
    # col_cid_ref : (1, NM)            i32      chain id per column (residue id repeated m times)
    # loss_ref    : (TILE_R, NM)       f32/bf16 pairwise loss tile (mask_fill = -1)
    # out_ref     : (1, 1, ACC_LANES)  f32      per-core packed [sum, count] lanes
    # acc_ref     : (TILE_R, ACC_LANES) f32     VMEM partial accumulator (resident across steps)
    step = pl.program_id(1)

    @pl.when(step == 0)
    def _init():
        acc_ref[...] = jnp.zeros_like(acc_ref)

    loss = loss_ref[...].astype(jnp.float32)          # upcast after the (possibly bf16) load
    row_cid = row_cid_ref[...]                        # (TILE_R, 1)
    col_cid = col_cid_ref[...]                        # (1, NM)

    valid = loss >= 0.0                               # pair_mask rebuilt in-kernel
    same = row_cid == col_cid                         # one compare covers every chain
    intra_mask = jnp.logical_and(valid, same)
    inter_mask = jnp.logical_xor(valid, intra_mask)   # == valid & ~same

    lo_i, hi_i = intra_clamp
    lo_e, hi_e = inter_clamp
    if lo_i == lo_e:                                  # share the lower clamp (FAPE: both 0)
        base = jnp.maximum(loss, lo_i)
        clamped_intra = jnp.minimum(base, hi_i)
        clamped_inter = jnp.minimum(base, hi_e)
    else:
        clamped_intra = jnp.clip(loss, lo_i, hi_i)
        clamped_inter = jnp.clip(loss, lo_e, hi_e)

    # Exactly four NM-wide lane reductions per tile (independent of num_chains).
    intra_sum = jnp.sum(jnp.where(intra_mask, clamped_intra, 0.0), axis=1, keepdims=True)
    inter_sum = jnp.sum(jnp.where(inter_mask, clamped_inter, 0.0), axis=1, keepdims=True)
    intra_cnt = jnp.sum(intra_mask.astype(jnp.float32), axis=1, keepdims=True)
    inter_cnt = jnp.sum(inter_mask.astype(jnp.float32), axis=1, keepdims=True)

    # Bin the tiny (TILE_R, 1) per-row partials into per-mask lanes:
    #   lane 2k   <- chain-k intra sum      lane 2k+1 <- chain-k intra count
    #   lane 2C   <- inter sum              lane 2C+1 <- inter count
    # Padded / phantom rows have row_cid == -1: 2*(-1) matches no lane, and the inter lanes are
    # gated by row_cid >= 0, so their (garbage) per-row partials are discarded without any
    # NM-wide validity AND.
    lane = lax.broadcasted_iota(jnp.int32, (1, ACC_LANES), 1)
    tgt = 2 * row_cid
    row_ok = row_cid >= 0
    contrib = jnp.where(lane == tgt, intra_sum, 0.0)
    contrib += jnp.where(lane == tgt + 1, intra_cnt, 0.0)
    contrib += jnp.where(jnp.logical_and(lane == 2 * num_chains, row_ok), inter_sum, 0.0)
    contrib += jnp.where(jnp.logical_and(lane == 2 * num_chains + 1, row_ok), inter_cnt, 0.0)
    acc_ref[...] += contrib                           # pure VPU add; no scalar RMW in the hot loop

    @pl.when(step == pl.num_programs(1) - 1)
    def _finalize():
        # One sublane reduce per core-group; lane-dense (128-wide) store.
        out_ref[0] = jnp.sum(acc_ref[...], axis=0, keepdims=True)


def pair_loss_sums(pair_loss, row_chain_id, col_chain_id, num_chains,
                   intra_clamp, inter_clamp, tile_r=None):
    """Returns (num_chains+1, 2) f32: per-chain [clamped sum, count]; last row = inter-chain."""
    n, nm = pair_loss.shape
    num_masks = num_chains + 1
    assert 2 * num_masks <= ACC_LANES, "too many chains for the lane-packed accumulator"

    itemsize = jnp.dtype(pair_loss.dtype).itemsize
    if tile_r is None:
        # Keep a single loss tile <= ~4 MiB so the double-buffered stream fits every generation's
        # scoped VMEM (v5e 16 MiB default scoped, v7x 64 MiB physical).
        tile_r = (4 * 1024 * 1024) // max(1, nm * itemsize)
        tile_r = max(16, min(1024, (tile_r // 16) * 16))
        tile_r = min(tile_r, max(16, _round_up(n, 16)))
    else:
        tile_r = max(8, (int(tile_r) // 8) * 8)

    n_tiles = _cdiv(n, tile_r)
    spc = _cdiv(n_tiles, NCORES)                      # steps per core-group
    n_rows_cov = NCORES * spc * tile_r
    last_tile = n_tiles - 1

    # Only the cheap (n,) chain-id vector is padded host-side; the big loss tensor is streamed
    # as-is (ragged / phantom tiles are neutralized via row_cid == -1 inside the kernel).
    row_cid = jnp.full((n_rows_cov,), -1, dtype=jnp.int32)
    row_cid = row_cid.at[:n].set(row_chain_id.astype(jnp.int32))
    row_cid2d = row_cid.reshape(n_rows_cov, 1)
    col_cid2d = col_chain_id.astype(jnp.int32).reshape(1, nm)

    kernel = functools.partial(
        _pair_loss_kernel,
        num_chains=num_chains,
        intra_clamp=(float(intra_clamp[0]), float(intra_clamp[1])),
        inter_clamp=(float(inter_clamp[0]), float(inter_clamp[1])),
    )

    per_core = pl.pallas_call(
        kernel,
        out_shape=jax.ShapeDtypeStruct((NCORES, 1, ACC_LANES), jnp.float32),
        grid=(NCORES, spc),
        in_specs=[
            pl.BlockSpec((tile_r, 1), lambda c, s: (c * spc + s, 0)),
            pl.BlockSpec((1, nm), lambda c, s: (0, 0)),
            # Phantom steps re-read the last real tile (clamped index -> no OOB DMA); their rows
            # carry row_cid == -1 so they contribute nothing.
            pl.BlockSpec((tile_r, nm),
                         lambda c, s: (jnp.minimum(c * spc + s, last_tile), 0)),
        ],
        out_specs=pl.BlockSpec((1, 1, ACC_LANES), lambda c, s: (c, 0, 0)),
        scratch_shapes=[pltpu.VMEM((tile_r, ACC_LANES), jnp.float32)],
        compiler_params=pltpu.CompilerParams(
            dimension_semantics=("parallel", "arbitrary"),
            vmem_limit_bytes=32 * 1024 * 1024),
    )(row_cid2d, col_cid2d, pair_loss)

    packed = jnp.sum(per_core.reshape(NCORES, ACC_LANES), axis=0)   # combine per-core partials
    return packed[: 2 * num_masks].reshape(num_masks, 2)


# --------------------------------------------------------------------------------------
# get_complex_pair_loss (Pallas-backed)
# --------------------------------------------------------------------------------------
def get_complex_pair_loss_pallas(pair_loss, res_chain_id, col_chain_id, num_chains,
                                 intra_clamp, inter_clamp, intra_scale, inter_scale,
                                 tile_r=None):
    sums = pair_loss_sums(pair_loss, res_chain_id, col_chain_id, num_chains,
                          intra_clamp, inter_clamp, tile_r=tile_r)      # (num_chains+1, 2)
    counts = jnp.maximum(sums[:, 1], 1.0)         # guard: empty mask -> 0, not NaN
    means = sums[:, 0] / counts
    intra_chain_loss = intra_scale * jnp.sum(means[:num_chains]) / num_chains
    inter_chain_loss = inter_scale * means[num_chains]
    return intra_chain_loss, inter_chain_loss


# --------------------------------------------------------------------------------------
# DefaultLossFunc wrapper (deterministic "config" parameters set in __init__)
# --------------------------------------------------------------------------------------
class DefaultLossFuncPallas:
    def __init__(self, mask_rel_wt=2.0, inter_fape_scale=1.0,
                 fape_wt=1.0, nsr_wt=0.5, n_fape_atom_tys=4, tile_r=None):
        self.unmask_wt = 1.0 / mask_rel_wt
        self.inter_fape_scale = inter_fape_scale
        self.loss_wts = {"fape": fape_wt, "nsr": nsr_wt}
        self.m = n_fape_atom_tys          # len(config.fape_atom_tys)
        self.tile_r = tile_r              # None -> auto-size from NM / VMEM budget

    @staticmethod
    def _res_chain_ids(n_res, chain_indices):
        cid = jnp.full((n_res,), -1, dtype=jnp.int32)
        for ci, idx in enumerate(chain_indices):
            cid = cid.at[jnp.asarray(idx, dtype=jnp.int32)].set(ci)
        return cid

    def forward(self, fape_pair_loss, chain_indices, nsr_res_loss, seq_mask,
                fape_clamp=(0.0, 10.0)):
        # fape_pair_loss: (1, n, n*m) with mask_fill = -1 (f32 or bf16); nsr_res_loss: (1, n)
        loss2d = fape_pair_loss[0]                             # keep native dtype for the stream
        n_res = loss2d.shape[0]
        num_chains = len(chain_indices)

        res_cid = self._res_chain_ids(n_res, chain_indices)   # (n,)
        # reshape_fn 'i j -> () i (j m)'  <=>  column j*m + a belongs to residue j
        col_cid = jnp.repeat(res_cid, self.m)                 # (n*m,)

        intra, inter = get_complex_pair_loss_pallas(
            loss2d, res_cid, col_cid, num_chains,
            intra_clamp=fape_clamp, inter_clamp=(0.0, 30.0),
            intra_scale=1.0 / 10.0,
            inter_scale=self.inter_fape_scale * (1.0 / 15.0),
            tile_r=self.tile_r,
        )

        # NSR-style per-residue loss: unmasked positions scaled by unmask_wt, then mean.
        # A (1, n) reduction is too small for its own pallas_call; let XLA fuse it.
        keep = seq_mask.astype(jnp.float32)                   # 1 = masked (keeps weight 1)
        w = keep + (1.0 - keep) * self.unmask_wt
        nsr = jnp.sum(nsr_res_loss.astype(jnp.float32) * w[None, :]) / nsr_res_loss.size

        # ModelLoss aggregation ~ weighted sum of scalar losses
        total = self.loss_wts["fape"] * (intra + inter) + self.loss_wts["nsr"] * nsr
        return {"intra-fape": intra, "inter-fape": inter, "nsr": nsr, "total": total}


# --------------------------------------------------------------------------------------
if __name__ == "__main__":
    key = jax.random.PRNGKey(0)
    n_res, m = 60, 4                       # ragged vs tile_r=8 -> exercises -1-padded rows
    nm = n_res * m
    chain_bounds = [(0, 28), (28, 60)]
    chain_indices = [jnp.arange(a, b) for a, b in chain_bounds]

    k1, k2, k3, k4 = jax.random.split(key, 4)
    raw = jax.random.uniform(k1, (1, n_res, nm), minval=0.0, maxval=20.0)
    drop = jax.random.uniform(k2, (1, n_res, nm)) < 0.1
    fape_pair_loss = jnp.where(drop, -1.0, raw)               # mask_fill = -1
    nsr_res_loss = jax.random.uniform(k3, (1, n_res))
    seq_mask = jax.random.uniform(k4, (n_res,)) < 0.5

    # -------- pure-numpy reference of the same semantics --------
    def ref_complex_pair(L):
        pm = L >= 0
        cmasks = []
        for a, b in chain_bounds:
            c = np.zeros(n_res, bool); c[a:b] = True; cmasks.append(c)
        pair_masks = [np.outer(c, c) for c in cmasks]
        union = np.zeros((n_res, n_res), bool)
        for pmk in pair_masks:
            union |= pmk
        inter_m = ~union
        rep = lambda x: np.repeat(x, m, axis=-1)
        intra = 0.0
        for pmk in pair_masks:
            msk = rep(pmk) & pm
            intra += np.clip(L[msk], 0.0, 10.0).mean()
        intra = (1.0 / 10.0) * intra / len(pair_masks)
        msk = rep(inter_m) & pm
        inter = (1.0 / 15.0) * np.clip(L[msk], 0.0, 30.0).mean()
        return intra, inter

    r = np.asarray(nsr_res_loss, np.float64).copy()
    sm = np.asarray(seq_mask)
    r[:, ~sm] = r[:, ~sm] * 0.5
    nsr_ref = r.mean()

    # ---- f32 stream, small tile so the multi-step accumulating + 2-group path is exercised ----
    loss_fn = DefaultLossFuncPallas(tile_r=8)
    out = loss_fn.forward(fape_pair_loss, chain_indices, nsr_res_loss, seq_mask)
    out = {k: jax.block_until_ready(v) for k, v in out.items()}

    intra_ref, inter_ref = ref_complex_pair(np.asarray(fape_pair_loss[0], np.float64))
    total_ref = 1.0 * (intra_ref + inter_ref) + 0.5 * nsr_ref
    assert np.allclose(float(out["intra-fape"]), intra_ref, rtol=1e-4, atol=1e-5)
    assert np.allclose(float(out["inter-fape"]), inter_ref, rtol=1e-4, atol=1e-5)
    assert np.allclose(float(out["nsr"]), nsr_ref, rtol=1e-4, atol=1e-5)
    assert np.allclose(float(out["total"]), total_ref, rtol=1e-4, atol=1e-5)

    # ---- bf16 stream (loss kept in bf16 in HBM, upcast in-kernel), bf16-friendly tile ----
    fape_bf16 = fape_pair_loss.astype(jnp.bfloat16)
    loss_fn16 = DefaultLossFuncPallas(tile_r=16)
    out16 = loss_fn16.forward(fape_bf16, chain_indices, nsr_res_loss, seq_mask)
    out16 = {k: jax.block_until_ready(v) for k, v in out16.items()}
    L16 = np.asarray(fape_bf16[0]).astype(np.float64)
    intra16_ref, inter16_ref = ref_complex_pair(L16)
    assert np.allclose(float(out16["intra-fape"]), intra16_ref, rtol=1e-3, atol=1e-4)
    assert np.allclose(float(out16["inter-fape"]), inter16_ref, rtol=1e-3, atol=1e-4)

    print("KERNEL_OK")
</pallas_src>

<mosaic_0001>
module attributes {stable_mosaic.version = 11 : i64} {
  func.func @_pair_loss_kernel(%arg0: i32, %arg1: i32, %arg2: memref<8x1xi32, #tpu.memory_space<vmem>>, %arg3: memref<1x240xi32, #tpu.memory_space<vmem>>, %arg4: memref<8x240xf32, #tpu.memory_space<vmem>>, %arg5: memref<1x1x128xf32, #tpu.memory_space<vmem>>, %arg6: memref<8x128xf32, #tpu.memory_space<vmem>>) attributes {dimension_semantics = [#tpu.dimension_semantics<parallel>, #tpu.dimension_semantics<arbitrary>], iteration_bounds = array<i64: 2, 4>, scalar_prefetch = 0 : i64, scratch_operands = 1 : i64, tpu.core_type = #tpu.core_type<tc>, window_params = [{transform_indices = @transform_0, window_bounds = array<i64: 8, 1>}, {pipeline_mode = #tpu.pipeline_mode<synchronous>, transform_indices = @transform_1, window_bounds = array<i64: 1, 240>}, {transform_indices = @transform_2, window_bounds = array<i64: 8, 240>}, {transform_indices = @transform_3, window_bounds = array<i64: 1, 1, 128>}]} {
    %c0_i32 = arith.constant 0 : i32
    %0 = arith.cmpi eq, %arg1, %c0_i32 : i32
    %1 = arith.extui %0 : i1 to i32
    %c0_i32_0 = arith.constant 0 : i32
    %2 = arith.cmpi ne, %1, %c0_i32_0 : i32
    scf.if %2 {
      %cst_25 = arith.constant 0.000000e+00 : f32
      %83 = vector.broadcast %cst_25 : f32 to vector<8x128xf32>
      %c0_26 = arith.constant 0 : index
      %c0_27 = arith.constant 0 : index
      %84 = vector.load %arg6[%c0_26, %c0_27] : memref<8x128xf32, #tpu.memory_space<vmem>>, vector<8x128xf32>
      tpu.vector_store %arg6[%c0_26, %c0_27], %83 {strides = array<i32>} : memref<8x128xf32, #tpu.memory_space<vmem>>, vector<8x128xf32>,
    } else {
    }
    %c0 = arith.constant 0 : index
    %c0_1 = arith.constant 0 : index
    %3 = vector.load %arg4[%c0, %c0_1] : memref<8x240xf32, #tpu.memory_space<vmem>>, vector<8x240xf32>
    %c0_2 = arith.constant 0 : index
    %c0_3 = arith.constant 0 : index
    %4 = vector.load %arg2[%c0_2, %c0_3] : memref<8x1xi32, #tpu.memory_space<vmem>>, vector<8x1xi32>
    %c0_4 = arith.constant 0 : index
    %c0_5 = arith.constant 0 : index
    %5 = vector.load %arg3[%c0_4, %c0_5] : memref<1x240xi32, #tpu.memory_space<vmem>>, vector<1x240xi32>
    %cst = arith.constant 0.000000e+00 : f32
    %6 = vector.broadcast %cst : f32 to vector<8x240xf32>
    %7 = arith.cmpf oge, %3, %6 : vector<8x240xf32>
    %8 = vector.broadcast %4 : vector<8x1xi32> to vector<8x240xi32>
    %9 = vector.broadcast %5 : vector<1x240xi32> to vector<8x240xi32>
    %10 = arith.cmpi eq, %8, %9 : vector<8x240xi32>
    %11 = arith.andi %7, %10 : vector<8x240xi1>
    %12 = arith.xori %7, %11 : vector<8x240xi1>
    %cst_6 = arith.constant 0.000000e+00 : f32
    %13 = vector.broadcast %cst_6 : f32 to vector<8x240xf32>
    %14 = arith.maximumf %3, %13 : vector<8x240xf32>
    %cst_7 = arith.constant 1.000000e+01 : f32
    %15 = vector.broadcast %cst_7 : f32 to vector<8x240xf32>
    %16 = arith.minimumf %14, %15 : vector<8x240xf32>
    %cst_8 = arith.constant 3.000000e+01 : f32
    %17 = vector.broadcast %cst_8 : f32 to vector<8x240xf32>
    %18 = arith.minimumf %14, %17 : vector<8x240xf32>
    %cst_9 = arith.constant 0.000000e+00 : f32
    %19 = vector.broadcast %cst_9 : f32 to vector<8x240xf32>
    %20 = arith.select %11, %16, %19 : vector<8x240xi1>, vector<8x240xf32>
    %cst_10 = arith.constant dense<0.000000e+00> : vector<8xf32>
    %21 = vector.multi_reduction <add>, %20, %cst_10 [1] : vector<8x240xf32> to vector<8xf32>
    %22 = vector.shape_cast %21 : vector<8xf32> to vector<8x1xf32>
    %cst_11 = arith.constant 0.000000e+00 : f32
    %23 = vector.broadcast %cst_11 : f32 to vector<8x240xf32>
    %24 = arith.select %12, %18, %23 : vector<8x240xi1>, vector<8x240xf32>
    %cst_12 = arith.constant dense<0.000000e+00> : vector<8xf32>
    %25 = vector.multi_reduction <add>, %24, %cst_12 [1] : vector<8x240xf32> to vector<8xf32>
    %26 = vector.shape_cast %25 : vector<8xf32> to vector<8x1xf32>
    %27 = arith.extui %11 : vector<8x240xi1> to vector<8x240xi32>
    %28 = arith.sitofp %27 : vector<8x240xi32> to vector<8x240xf32>
    %cst_13 = arith.constant dense<0.000000e+00> : vector<8xf32>
    %29 = vector.multi_reduction <add>, %28, %cst_13 [1] : vector<8x240xf32> to vector<8xf32>
    %30 = vector.shape_cast %29 : vector<8xf32> to vector<8x1xf32>
    %31 = arith.extui %12 : vector<8x240xi1> to vector<8x240xi32>
    %32 = arith.sitofp %31 : vector<8x240xi32> to vector<8x240xf32>
    %cst_14 = arith.constant dense<0.000000e+00> : vector<8xf32>
    %33 = vector.multi_reduction <add>, %32, %cst_14 [1] : vector<8x240xf32> to vector<8xf32>
    %34 = vector.shape_cast %33 : vector<8xf32> to vector<8x1xf32>
    %35 = tpu.iota {dimensions = array<i32: 1>} : vector<1x128xi32>
    %c2_i32 = arith.constant 2 : i32
    %36 = vector.broadcast %c2_i32 : i32 to vector<8x1xi32>
    %37 = arith.muli %36, %4 : vector<8x1xi32>
    %c0_i32_15 = arith.constant 0 : i32
    %38 = vector.broadcast %c0_i32_15 : i32 to vector<8x1xi32>
    %39 = arith.cmpi sge, %4, %38 : vector<8x1xi32>
    %40 = vector.broadcast %35 : vector<1x128xi32> to vector<8x128xi32>
    %41 = vector.broadcast %37 : vector<8x1xi32> to vector<8x128xi32>
    %42 = arith.cmpi eq, %40, %41 : vector<8x128xi32>
    %cst_16 = arith.constant 0.000000e+00 : f32
    %43 = vector.shape_cast %22 : vector<8x1xf32> to vector<8x1xf32>
    %44 = vector.broadcast %43 : vector<8x1xf32> to vector<8x128xf32>
    %45 = vector.broadcast %cst_16 : f32 to vector<8x128xf32>
    %46 = arith.select %42, %44, %45 : vector<8x128xi1>, vector<8x128xf32>
    %c1_i32 = arith.constant 1 : i32
    %47 = vector.broadcast %c1_i32 : i32 to vector<8x1xi32>
    %48 = arith.addi %37, %47 : vector<8x1xi32>
    %49 = vector.broadcast %35 : vector<1x128xi32> to vector<8x128xi32>
    %50 = vector.broadcast %48 : vector<8x1xi32> to vector<8x128xi32>
    %51 = arith.cmpi eq, %49, %50 : vector<8x128xi32>
    %cst_17 = arith.constant 0.000000e+00 : f32
    %52 = vector.shape_cast %30 : vector<8x1xf32> to vector<8x1xf32>
    %53 = vector.broadcast %52 : vector<8x1xf32> to vector<8x128xf32>
    %54 = vector.broadcast %cst_17 : f32 to vector<8x128xf32>
    %55 = arith.select %51, %53, %54 : vector<8x128xi1>, vector<8x128xf32>
    %56 = arith.addf %46, %55 : vector<8x128xf32>
    %c4_i32 = arith.constant 4 : i32
    %57 = vector.broadcast %c4_i32 : i32 to vector<1x128xi32>
    %58 = arith.cmpi eq, %35, %57 : vector<1x128xi32>
    %59 = vector.broadcast %58 : vector<1x128xi1> to vector<8x128xi1>
    %60 = vector.broadcast %39 : vector<8x1xi1> to vector<8x128xi1>
    %61 = arith.andi %59, %60 : vector<8x128xi1>
    %cst_18 = arith.constant 0.000000e+00 : f32
    %62 = vector.shape_cast %26 : vector<8x1xf32> to vector<8x1xf32>
    %63 = vector.broadcast %62 : vector<8x1xf32> to vector<8x128xf32>
    %64 = vector.broadcast %cst_18 : f32 to vector<8x128xf32>
    %65 = arith.select %61, %63, %64 : vector<8x128xi1>, vector<8x128xf32>
    %66 = arith.addf %56, %65 : vector<8x128xf32>
    %c5_i32 = arith.constant 5 : i32
    %67 = vector.broadcast %c5_i32 : i32 to vector<1x128xi32>
    %68 = arith.cmpi eq, %35, %67 : vector<1x128xi32>
    %69 = vector.broadcast %68 : vector<1x128xi1> to vector<8x128xi1>
    %70 = vector.broadcast %39 : vector<8x1xi1> to vector<8x128xi1>
    %71 = arith.andi %69, %70 : vector<8x128xi1>
    %cst_19 = arith.constant 0.000000e+00 : f32
    %72 = vector.shape_cast %34 : vector<8x1xf32> to vector<8x1xf32>
    %73 = vector.broadcast %72 : vector<8x1xf32> to vector<8x128xf32>
    %74 = vector.broadcast %cst_19 : f32 to vector<8x128xf32>
    %75 = arith.select %71, %73, %74 : vector<8x128xi1>, vector<8x128xf32>
    %76 = arith.addf %66, %75 : vector<8x128xf32>
    %c0_20 = arith.constant 0 : index
    %c0_21 = arith.constant 0 : index
    %77 = vector.load %arg6[%c0_20, %c0_21] : memref<8x128xf32, #tpu.memory_space<vmem>>, vector<8x128xf32>
    %78 = arith.addf %77, %76 : vector<8x128xf32>
    %c0_22 = arith.constant 0 : index
    %c0_23 = arith.constant 0 : index
    %79 = vector.load %arg6[%c0_22, %c0_23] : memref<8x128xf32, #tpu.memory_space<vmem>>, vector<8x128xf32>
    tpu.vector_store %arg6[%c0_22, %c0_23], %78 {strides = array<i32>} : memref<8x128xf32, #tpu.memory_space<vmem>>, vector<8x128xf32>,
    %c3_i32 = arith.constant 3 : i32
    %80 = arith.cmpi eq, %arg1, %c3_i32 : i32
    %81 = arith.extui %80 : i1 to i32
    %c0_i32_24 = arith.constant 0 : i32
    %82 = arith.cmpi ne, %81, %c0_i32_24 : i32
    scf.if %82 {
      %c0_25 = arith.constant 0 : index
      %c0_26 = arith.constant 0 : index
      %83 = vector.load %arg6[%c0_25, %c0_26] : memref<8x128xf32, #tpu.memory_space<vmem>>, vector<8x128xf32>
      %cst_27 = arith.constant dense<0.000000e+00> : vector<128xf32>
      %84 = vector.multi_reduction <add>, %83, %cst_27 [0] : vector<8x128xf32> to vector<128xf32>
      %85 = vector.shape_cast %84 : vector<128xf32> to vector<1x128xf32>
      %c0_28 = arith.constant 0 : index
      %c0_29 = arith.constant 0 : index
      %c0_30 = arith.constant 0 : index
      %86 = vector.load %arg5[%c0_28, %c0_29, %c0_30] : memref<1x1x128xf32, #tpu.memory_space<vmem>>, vector<1x1x128xf32>
      %87 = vector.shape_cast %86 : vector<1x1x128xf32> to vector<1x128xf32>
      %88 = vector.shape_cast %85 : vector<1x128xf32> to vector<1x1x128xf32>
      tpu.vector_store %arg5[%c0_28, %c0_29, %c0_30], %88 {strides = array<i32>} : memref<1x1x128xf32, #tpu.memory_space<vmem>>, vector<1x1x128xf32>,
    } else {
    }
    return
  }
  func.func @transform_0(%arg0: i32, %arg1: i32) -> (i32, i32) {
    %c4_i32 = arith.constant 4 : i32
    %0 = arith.muli %arg0, %c4_i32 : i32
    %1 = arith.addi %0, %arg1 : i32
    %c0_i32 = arith.constant 0 : i32
    %c0_i32_0 = arith.constant 0 : i32
    return %1, %c0_i32 : i32, i32
  }
  func.func @transform_1(%arg0: i32, %arg1: i32) -> (i32, i32) {
    %c0_i32 = arith.constant 0 : i32
    %c0_i32_0 = arith.constant 0 : i32
    %c0_i32_1 = arith.constant 0 : i32
    return %c0_i32, %c0_i32_0 : i32, i32
  }
  func.func @transform_2(%arg0: i32, %arg1: i32) -> (i32, i32) {
    %c4_i32 = arith.constant 4 : i32
    %0 = arith.muli %arg0, %c4_i32 : i32
    %1 = arith.addi %0, %arg1 : i32
    %c7_i32 = arith.constant 7 : i32
    %2 = arith.minsi %1, %c7_i32 : i32
    %c0_i32 = arith.constant 0 : i32
    %c0_i32_0 = arith.constant 0 : i32
    return %2, %c0_i32 : i32, i32
  }
  func.func @transform_3(%arg0: i32, %arg1: i32) -> (i32, i32, i32) {
    %c0_i32 = arith.constant 0 : i32
    %c0_i32_0 = arith.constant 0 : i32
    %c0_i32_1 = arith.constant 0 : i32
    return %arg0, %c0_i32, %c0_i32_0 : i32, i32, i32
  }
}

</mosaic_0001>

<llo_original>
// kernel: tpu_custom_call.1
$region0: #{tpu_custom_call.1}
  #allocation0 [shape = 'u32[]', space=smem, size = 0x4, offset = 0x4, fixed_abs, tag = 'smem constant byte address 0x4 - core index']
  #allocation1 [shape = 'u32[144,128]{1,0:T(1,128)}', space=vmem, size = 0x12000, scoped, tag = 'internal scratch']
  #allocation2 [shape = 'f32[8,128]{1,0:T(8,128)}', space=vmem, size = 0x1000, scoped, tag = 'scratch operand']
  %s0 = inlined_call_operand.vmem [shape: s32[64,1], index: 0, kind: input, shape index: {}]
  %s1 = inlined_call_operand.vmem [shape: s32[1,240], index: 1, kind: input, shape index: {}]
  %s2 = inlined_call_operand.hbm [shape: f32[60,240], index: 2, kind: input, shape index: {}]
  %s3 = inlined_call_operand.hbm [shape: f32[2,1,128], index: 3, kind: output, shape index: {}]
  %s4 = sld [smem:[#allocation0]]
  $region57: #{tpu_custom_call.1} parent=0
    _
  %s6 = ssub.s32 1, %s4
  %s7 = scalar_select 0, %s6, %s4
  $region1: #{tpu_custom_call.1} parent=0
    #allocation3 [shape = 'u8[16384]{0}', space=vmem, size = 0x4000, scoped, tag = 'input window, operand 2']
    #allocation4 [shape = 's32[2]{0}', space=sflag, size = 0x8, scoped, tag = 'scoped memory for tpu_custom_call.1']
    #allocation5 [shape = 's32[2]{0}', space=sflag, size = 0x8, scoped, tag = 'scoped memory for tpu_custom_call.1']
    #allocation6 [shape = 'u8[1024]{0}', space=vmem, size = 0x400, scoped, tag = 'output window, operand 0']
    %8 = vsyncpa [#allocation4], 0
    %s9 = scalar_lea.sflag [#allocation4], 1
    %10 = vsyncpa %s9, 0
    %11 = vsyncpa [#allocation5], 0
    %s12 = scalar_lea.sflag [#allocation5], 1
    %13 = vsyncpa %s12, 0
    loop: start=0, step=1, limit=10
    $region2: #{tpu_custom_call.1} parent=1 // loop_pre_header
      _
    $region3: #{tpu_custom_call.1} parent=1 // loop_header
      %s15 = sphi 0, %s19
      %p16 = scmp.ge.s32.totalorder %s15, 10
      %s22 = sphi 0, %s34
      %s23 = sphi 0, %s30
      %s24 = sphi 0, %s22
      %s25 = sphi 0, %s23
      %s26 = sphi 0, %s24
      %s27 = sphi 0, %s25
      %s41 = sphi 0, %s43
      %s44 = sphi 0, %s41
      %s45 = sphi 0, %s44
      %s61 = sphi 0, %s45
      %s65 = sphi 0, %s65
      %s67 = sphi 0, %s65
      %s68 = sphi 0, %s67
      %s82 = sphi 0, %s68
      %s96 = sphi 0, %s98
      %s99 = sphi 0, %s96
      %s100 = sphi 0, %s99
      %s116 = sphi 0, %s100
      %s122 = sphi 0, %s124
      %s125 = sphi 0, %s122
      %s126 = sphi 0, %s125
      %s142 = sphi 0, %s126
    $region4: #{tpu_custom_call.1} parent=1 // loop_header_branch
      %18 = sbr.rel (%p16) target = $region8
    $region5: #{tpu_custom_call.1} parent=1 // loop_body
      %s20 = ssub.s32 %s15, 1
      %s21 = ssub.s32 %s15, 2
      %s28 = sadd.s32 1, %s23
      %p29 = scmp.ge.s32.totalorder %s28, 4
      %s30 = scalar_select %p29, 0, %s28
      %s31 = sadd.s32 1, %s22
      %s32 = scalar_select %p29, %s31, %s22
      %p33 = scmp.ge.s32.totalorder %s32, 2
      %s34 = scalar_select %p33, 0, %s32
      %s35 = smul.u32 %s22, 4
      %s36 = sadd.s32 %s35, %s23
      %s37 = smul.u32 %s34, 4
      %s38 = sadd.s32 %s37, %s30
      %s39 = ssub.s32 %s36, %s38
      %p40 = scmp.eq.s32.totalorder %s39, 0
      %s42 = sadd.s32 %s41, 1
      %s43 = scalar_select %p40, %s41, %s42
      %p46 = pneg %p40
      %p47 = scmp.eq.s32.totalorder %s15, 7
      %p48 = por %p46, %p47
      %p49 = scmp.ne.s32.totalorder %s41, %s44
      %p50 = scmp.eq.s32.totalorder %s15, 0
      %p51 = por %p49, %p50
      %p52 = scmp.ne.s32.totalorder %s41, %s44
      %p53 = scmp.eq.s32.totalorder %s20, 7
      %p54 = por %p52, %p53
      %p55 = scmp.ne.s32.totalorder %s44, %s45
      %p56 = scmp.eq.s32.totalorder %s20, 0
      %p57 = por %p55, %p56
      %p58 = scmp.ne.s32.totalorder %s44, %s45
      %p59 = scmp.eq.s32.totalorder %s21, 7
      %p60 = por %p58, %p59
      %p62 = scmp.ne.s32.totalorder %s45, %s61
      %p63 = scmp.eq.s32.totalorder %s21, 0
      %p64 = por %p62, %p63
      %s66 = sadd.s32 %s65, 1
      %p69 = scmp.eq.s32.totalorder %s15, 7
      %p70 = scmp.ne.s32.totalorder %s65, %s67
      %p71 = scmp.eq.s32.totalorder %s15, 0
      %p72 = por %p70, %p71
      %p73 = scmp.ne.s32.totalorder %s65, %s67
      %p74 = scmp.eq.s32.totalorder %s20, 7
      %p75 = por %p73, %p74
      %p76 = scmp.ne.s32.totalorder %s67, %s68
      %p77 = scmp.eq.s32.totalorder %s20, 0
      %p78 = por %p76, %p77
      %p79 = scmp.ne.s32.totalorder %s67, %s68
      %p80 = scmp.eq.s32.totalorder %s21, 7
      %p81 = por %p79, %p80
      %p83 = scmp.ne.s32.totalorder %s68, %s82
      %p84 = scmp.eq.s32.totalorder %s21, 0
      %p85 = por %p83, %p84
      %s86 = smul.u32 %s22, 4
      %s87 = sadd.s32 %s86, %s23
      %p88 = scmp.lt.s32.totalorder %s87, 7
      %s89 = scalar_select %p88, %s87, 7
      %s90 = smul.u32 %s34, 4
      %s91 = sadd.s32 %s90, %s30
      %p92 = scmp.lt.s32.totalorder %s91, 7
      %s93 = scalar_select %p92, %s91, 7
      %s94 = ssub.s32 %s89, %s93
      %p95 = scmp.eq.s32.totalorder %s94, 0
      %s97 = sadd.s32 %s96, 1
      %s98 = scalar_select %p95, %s96, %s97
      %p101 = pneg %p95
      %p102 = scmp.eq.s32.totalorder %s15, 7
      %p103 = por %p101, %p102
      %p104 = scmp.ne.s32.totalorder %s96, %s99
      %p105 = scmp.eq.s32.totalorder %s15, 0
      %p106 = por %p104, %p105
      %p107 = scmp.ne.s32.totalorder %s96, %s99
      %p108 = scmp.eq.s32.totalorder %s20, 7
      %p109 = por %p107, %p108
      %p110 = scmp.ne.s32.totalorder %s99, %s100
      %p111 = scmp.eq.s32.totalorder %s20, 0
      %p112 = por %p110, %p111
      %p113 = scmp.ne.s32.totalorder %s99, %s100
      %p114 = scmp.eq.s32.totalorder %s21, 7
      %p115 = por %p113, %p114
      %p117 = scmp.ne.s32.totalorder %s100, %s116
      %p118 = scmp.eq.s32.totalorder %s21, 0
      %p119 = por %p117, %p118
      %s120 = ssub.s32 %s22, %s34
      %p121 = scmp.eq.s32.totalorder %s120, 0
      %s123 = sadd.s32 %s122, 1
      %s124 = scalar_select %p121, %s122, %s123
      %p127 = pneg %p121
      %p128 = scmp.eq.s32.totalorder %s15, 7
      %p129 = por %p127, %p128
      %p130 = scmp.ne.s32.totalorder %s122, %s125
      %p131 = scmp.eq.s32.totalorder %s15, 0
      %p132 = por %p130, %p131
      %p133 = scmp.ne.s32.totalorder %s122, %s125
      %p134 = scmp.eq.s32.totalorder %s20, 7
      %p135 = por %p133, %p134
      %p136 = scmp.ne.s32.totalorder %s125, %s126
      %p137 = scmp.eq.s32.totalorder %s20, 0
      %p138 = por %p136, %p137
      %p139 = scmp.ne.s32.totalorder %s125, %s126
      %p140 = scmp.eq.s32.totalorder %s21, 7
      %p141 = por %p139, %p140
      %p143 = scmp.ne.s32.totalorder %s126, %s142
      %p144 = scmp.eq.s32.totalorder %s21, 0
      %p145 = por %p143, %p144
      %p146 = scmp.le.s32.totalorder 1, %s15
      %p147 = scmp.lt.s32.totalorder %s15, 9
      %p148 = pnand %p146, %p147
      %p149 = pneg %p148
      // Predicated region
      $region9: #{tpu_custom_call.1} parent=5 // pred_check
        _
      $region10: #{tpu_custom_call.1} parent=5 // pred_check_branch
        %151 = sbr.rel (%p148) target = $region12
      $region11: #{tpu_custom_call.1} parent=5 // pred_region
        %s152 = ssub.s32 %s15, 1
        // Predicated region
        $region13: #{tpu_custom_call.1} parent=11 // pred_check
          %p153 = pneg %p78
        $region14: #{tpu_custom_call.1} parent=11 // pred_check_branch
          %155 = sbr.rel (%p153) target = $region16
        $region15: #{tpu_custom_call.1} parent=11 // pred_region
          _
        $region16: #{tpu_custom_call.1} parent=11 // pred_fallthru
          _
      $region12: #{tpu_custom_call.1} parent=5 // pred_fallthru
        _
      %p156 = scmp.lt.s32.totalorder %s15, 8
      // Predicated region
      $region17: #{tpu_custom_call.1} parent=5 // pred_check
        %p157 = pneg %p156
      $region18: #{tpu_custom_call.1} parent=5 // pred_check_branch
        %159 = sbr.rel (%p157) target = $region20
      $region19: #{tpu_custom_call.1} parent=5 // pred_region
        // Predicated region
        $region21: #{tpu_custom_call.1} parent=19 // pred_check
          %p160 = pneg %p51
        $region22: #{tpu_custom_call.1} parent=19 // pred_check_branch
          %162 = sbr.rel (%p160) target = $region24
        $region23: #{tpu_custom_call.1} parent=19 // pred_region
          %s163 = smul.u32 %s22, 4
          %s164 = sadd.s32 %s163, %s23
          %p165 = scmp.lt.s32.totalorder %s164, 7
          %s166 = scalar_select %p165, %s164, 7
          %s167 = smul.addr %s166, 8
          %s168 = scalar_lea.vmem %s0, %s167
          %s169 = smul.u32 %s22, 4
          %s170 = sadd.s32 %s169, %s23
        $region24: #{tpu_custom_call.1} parent=19 // pred_fallthru
          _
        // Predicated region
        $region25: #{tpu_custom_call.1} parent=19 // pred_check
          %p171 = pneg %p106
        $region26: #{tpu_custom_call.1} parent=19 // pred_check_branch
          %173 = sbr.rel (%p171) target = $region28
        $region27: #{tpu_custom_call.1} parent=19 // pred_region
          %s174 = sand.u32 %s96, 1
          %s175 = scalar_lea.sflag [#allocation4], %s174
          %s176 = sand.u32 %s96, 1
          %s177 = smul.addr %s176, 16
          %s178 = scalar_lea.vmem [#allocation3], %s177
          %s179 = smul.u32 %s22, 4
          %s180 = sadd.s32 %s179, %s23
          %p181 = scmp.lt.s32.totalorder %s180, 7
          %s182 = scalar_select %p181, %s180, 7
          %s184 = ssub.s32 256, 256
          %185 = vsyncadd %s175, %s184
          %s186 = smul.addr %s182, 2
          %s187 = smul.addr %s186, 128
          %s188 = scalar_lea.hbm %s2, %s187
          %s190 = sshll.u32 %s178, 4
          %s191 = int_to_ptr.vmem [resolvable:$true] %s190
          %193 = dma.hbm_to_vmem [thread:$0]  %s188, 256, %s191, %s175
        $region28: #{tpu_custom_call.1} parent=19 // pred_fallthru
          _
      $region20: #{tpu_custom_call.1} parent=5 // pred_fallthru
        _
      %p194 = scmp.le.s32.totalorder 1, %s15
      %p195 = scmp.lt.s32.totalorder %s15, 9
      %p196 = pnand %p194, %p195
      %p197 = pneg %p196
      // Predicated region
      $region29: #{tpu_custom_call.1} parent=5 // pred_check
        _
      $region30: #{tpu_custom_call.1} parent=5 // pred_check_branch
        %199 = sbr.rel (%p196) target = $region32
      $region31: #{tpu_custom_call.1} parent=5 // pred_region
        %s200 = ssub.s32 %s15, 1
        %s201 = sand.u32 %s99, 1
        %s202 = scalar_lea.sflag [#allocation4], %s201
        %s203 = sand.u32 %s99, 1
        %s204 = smul.addr %s203, 16
        %s205 = scalar_lea.vmem [#allocation3], %s204
        // Predicated region
        $region33: #{tpu_custom_call.1} parent=31 // pred_check
          %p206 = pneg %p112
        $region34: #{tpu_custom_call.1} parent=31 // pred_check_branch
          %208 = sbr.rel (%p206) target = $region36
        $region35: #{tpu_custom_call.1} parent=31 // pred_region
          %209 = dma.done %s202, 256
        $region36: #{tpu_custom_call.1} parent=31 // pred_fallthru
          _
        %s210 = smul.u32 %s24, 4
        %s211 = sadd.s32 %s210, %s25
        %p212 = scmp.lt.s32.totalorder %s211, 7
        %s213 = scalar_select %p212, %s211, 7
        %s214 = smul.addr %s213, 8
        %s215 = scalar_lea.vmem %s0, %s214
        %p216 = pneg %p57
        %p217 = pneg %p54
        %p218 = pneg %p78
        %p219 = pneg %p75
        %s220 = sand.u32 %s99, 1
        %s221 = scalar_lea.sflag [#allocation4], %s220
        %s222 = sand.u32 %s99, 1
        %s223 = smul.addr %s222, 16
        %s224 = scalar_lea.vmem [#allocation3], %s223
        %p225 = pneg %p112
        %p226 = pneg %p109
        %p227 = pneg %p138
        %p228 = pneg %p135
        %s229 = sand.u32 %s125, 1
        %s230 = scalar_lea.sflag [#allocation5], %s229
        %s231 = sand.u32 %s125, 1
        %s232 = scalar_lea.vmem [#allocation6], %s231
        %s233 = smul.u32 %s24, 4
        %s234 = sadd.s32 %s233, %s25
        %p235 = scmp.lt.s32.totalorder %s234, 7
        %s236 = scalar_select %p235, %s234, 7
        %s237 = smul.addr %s236, 8
        %s238 = scalar_lea.vmem %s0, %s237
        %s239 = smul.u32 %s24, 4
        %s240 = sadd.s32 %s239, %s25
        %s241 = smul.u32 %s24, 4
        %s242 = sadd.s32 %s241, %s25
        %p243 = scmp.lt.s32.totalorder %s242, 7
        %s244 = scalar_select %p243, %s242, 7
        %p245 = scmp.eq.s32.totalorder %s25, 0
        // Predicated region
        $region37: #{tpu_custom_call.1} parent=31 // pred_check
          %p246 = pneg %p245
        $region38: #{tpu_custom_call.1} parent=31 // pred_check_branch
          %248 = sbr.rel (%p246) target = $region40
        $region39: #{tpu_custom_call.1} parent=31 // pred_region
          %249 = vst [vmem:[#allocation2] sm:$0xff] 0.0
        $region40: #{tpu_custom_call.1} parent=31 // pred_fallthru
          _
        %v250 = vld [vmem:[%s205] sm:$0xff]
        %v251 = vld [vmem:[%s205 + $0x8] sm:$0xff]
        %v252 = vld [vmem:[%s238] sm:$0xff]
        %v253 = vld [vmem:[%s1] sm:$0x3]
        %vm254 = vcmp.ge.f32.partialorder %v250, 0.0
        %vm255 = vcmp.ge.f32.partialorder %v251, 0.0
        %256 = vset.pattern.permute.xlu0 0
        %257 = vperm.xlu0 %256, %v252
        %v258 = vpop.permute.xlu0 %257
        %v259 = vlaneseq
        %v260 = vshrl.u32 %v259, 7
        %v261 = vsub.s32 0, %v260
        %v262 = vrot.slane %v253, %v261
        %v263 = vlaneseq
        %v264 = vshrl.u32 %v263, 7
        %v265 = vsub.s32 1, %v264
        %v266 = vrot.slane %v253, %v265
        %vm267 = vcmp.eq.s32.totalorder %v258, %v262
        %vm268 = vcmp.eq.s32.totalorder %v258, %v266
        %vm269 = vmand %vm254, %vm267
        %vm270 = vmand %vm255, %vm268
        %vm271 = vmxor %vm254, %vm269
        %vm272 = vmxor %vm255, %vm270
        %v273 = vmax.f32 %v250, 0.0
        %v274 = vmax.f32 %v251, 0.0
        %v275 = vmin.f32 %v273, 10.0
        %v276 = vmin.f32 %v274, 10.0
        %v277 = vmin.f32 %v273, 30.0
        %v278 = vmin.f32 %v274, 30.0
        %v279 = vsel %vm269, %v275, 0.0
        %v280 = vsel %vm270, %v276, 0.0
        %vm281 = vcmask 916480
        %v282 = vsel %vm281, %v280, 0.0
        %v283 = vadd.f32 %v279, %v282
        %284 = vadd.xlane.f32.xlu0 %v283
        %v285 = vpop.xlane.xlu0 %284
        %v286 = vsel %vm271, %v277, 0.0
        %v287 = vsel %vm272, %v278, 0.0
        %v288 = vsel %vm281, %v287, 0.0
        %v289 = vadd.f32 %v286, %v288
        %290 = vadd.xlane.f32.xlu0 %v289
        %v291 = vpop.xlane.xlu0 %290
        %v292 = vsel %vm269, 1, 0
        %v293 = vsel %vm270, 1, 0
        %v294 = vcvt.s32.f32 %v292
        %v295 = vcvt.s32.f32 %v293
        %v296 = vsel %vm281, %v295, 0.0
        %v297 = vadd.f32 %v294, %v296
        %298 = vadd.xlane.f32.xlu0 %v297
        %v299 = vpop.xlane.xlu0 %298
        %v300 = vsel %vm271, 1, 0
        %v301 = vsel %vm272, 1, 0
        %v302 = vcvt.s32.f32 %v300
        %v303 = vcvt.s32.f32 %v301
        %v304 = vsel %vm281, %v303, 0.0
        %v305 = vadd.f32 %v302, %v304
        %306 = vadd.xlane.f32.xlu0 %v305
        %v307 = vpop.xlane.xlu0 %306
        %v308 = vlaneseq
        %v309 = vand.u32 %v308, 127
        %v310 = vmul.u32 %v252, 2
        %vm311 = vcmp.ge.s32.totalorder %v252, 0
        %312 = vset.pattern.permute.xlu0 0
        %313 = vperm.xlu0 %312, %v310
        %v314 = vpop.permute.xlu0 %313
        %vm315 = vcmp.eq.s32.totalorder %v309, %v314
        %v316 = vsel %vm315, %v285, 0.0
        %v317 = vadd.s32 %v310, 1
        %318 = vset.pattern.permute.xlu0 0
        %319 = vperm.xlu0 %318, %v317
        %v320 = vpop.permute.xlu0 %319
        %vm321 = vcmp.eq.s32.totalorder %v309, %v320
        %v322 = vsel %vm321, %v299, 0.0
        %v323 = vadd.f32 %v316, %v322
        %vm324 = vcmp.eq.s32.totalorder %v309, 4
        %v325 = vsel %vm324, 1, 0
        %vm326 = vcmp.eq.s32.totalorder %v325, 1
        %v327 = vsel %vm311, 1, 0
        %328 = vset.pattern.permute.xlu0 0
        %329 = vperm.xlu0 %328, %v327
        %v330 = vpop.permute.xlu0 %329
        %vm331 = vcmp.eq.s32.totalorder %v330, 1
        %vm332 = vmand %vm326, %vm331
        %v333 = vsel %vm332, %v291, 0.0
        %v334 = vadd.f32 %v323, %v333
        %vm335 = vcmp.eq.s32.totalorder %v309, 5
        %v336 = vsel %vm335, 1, 0
        %vm337 = vcmp.eq.s32.totalorder %v336, 1
        %vm338 = vmand %vm337, %vm331
        %v339 = vsel %vm338, %v307, 0.0
        %v340 = vadd.f32 %v334, %v339
        %v341 = vld [vmem:[#allocation2] sm:$0xff]
        %v342 = vadd.f32 %v341, %v340
        %343 = vst [vmem:[#allocation2] sm:$0xff] %v342
        %p344 = scmp.eq.s32.totalorder %s25, 3
        // Predicated region
        $region41: #{tpu_custom_call.1} parent=31 // pred_check
          %p345 = pneg %p344
        $region42: #{tpu_custom_call.1} parent=31 // pred_check_branch
          %347 = sbr.rel (%p345) target = $region44
        $region43: #{tpu_custom_call.1} parent=31 // pred_region
          %v348 = vld [vmem:[#allocation2] sm:$0xff]
          %v349 = vrot.slane %v348, 4
          %v350 = vadd.f32 %v348, %v349
          %v351 = vrot.slane %v350, 2
          %v352 = vadd.f32 %v350, %v351
          %v353 = vrot.slane %v352, 1
          %v354 = vadd.f32 %v352, %v353
          %355 = vst [vmem:[%s232] sm:$0x1] %v354
        $region44: #{tpu_custom_call.1} parent=31 // pred_fallthru
          _
        %s356 = sand.u32 %s125, 1
        %s357 = scalar_lea.sflag [#allocation5], %s356
        %s358 = sand.u32 %s125, 1
        %s359 = scalar_lea.vmem [#allocation6], %s358
        // Predicated region
        $region45: #{tpu_custom_call.1} parent=31 // pred_check
          %p360 = pneg %p135
        $region46: #{tpu_custom_call.1} parent=31 // pred_check_branch
          %362 = sbr.rel (%p360) target = $region48
        $region47: #{tpu_custom_call.1} parent=31 // pred_region
          %s364 = ssub.s32 16, 16
          %365 = vsyncadd %s357, %s364
          %s366 = smul.addr %s24, 16
          %s367 = scalar_lea.hbm %s3, %s366
          %s369 = sshll.u32 %s359, 4
          %s370 = int_to_ptr.vmem [resolvable:$true] %s369
          %372 = dma.vmem_to_hbm [thread:$0]  %s370, 16, %s367, %s357
        $region48: #{tpu_custom_call.1} parent=31 // pred_fallthru
          _
      $region32: #{tpu_custom_call.1} parent=5 // pred_fallthru
        _
      %p373 = scmp.le.s32.totalorder 2, %s15
      // Predicated region
      $region49: #{tpu_custom_call.1} parent=5 // pred_check
        %p374 = pneg %p373
      $region50: #{tpu_custom_call.1} parent=5 // pred_check_branch
        %376 = sbr.rel (%p374) target = $region52
      $region51: #{tpu_custom_call.1} parent=5 // pred_region
        %s377 = ssub.s32 %s15, 2
        // Predicated region
        $region53: #{tpu_custom_call.1} parent=51 // pred_check
          %p378 = pneg %p141
        $region54: #{tpu_custom_call.1} parent=51 // pred_check_branch
          %380 = sbr.rel (%p378) target = $region56
        $region55: #{tpu_custom_call.1} parent=51 // pred_region
          %s381 = sand.u32 %s126, 1
          %s382 = scalar_lea.sflag [#allocation5], %s381
          %s383 = sand.u32 %s126, 1
          %s384 = scalar_lea.vmem [#allocation6], %s383
          %385 = dma.done %s382, 16
        $region56: #{tpu_custom_call.1} parent=51 // pred_fallthru
          _
      $region52: #{tpu_custom_call.1} parent=5 // pred_fallthru
        _
    $region6: #{tpu_custom_call.1} parent=1 // loop_footer
      %s19 = sadd.s32 1, %s15
    $region7: #{tpu_custom_call.1} parent=1 // loop_footer_branch
      %14 = sbr.rel target = $region3
    $region8: #{tpu_custom_call.1} parent=1 // loop_exit
      _
    %386 = vsyncpa [#allocation4], 1
    %s387 = scalar_lea.sflag [#allocation4], 1
    %388 = vsyncpa %s387, 1
    %389 = vsyncpa [#allocation5], 1
    %s390 = scalar_lea.sflag [#allocation5], 1
    %391 = vsyncpa %s390, 1

</llo_original>
